<compile_context>
chip_gen: v5e
topology: v5e:2x2
jax: 0.10.0
libtpu: 0.0.40
codegen_flags: <defaults>
</compile_context>

<pallas_src>
import functools
import math

import jax
import jax.numpy as jnp
from jax.experimental import pallas as pl
from jax.experimental.pallas import tpu as pltpu


# ----------------------------- model config ---------------------------------
B = 2
T = 64                 # rows = B*T = 128
D_MODEL = 128          # lane-dense (multiple of 128)
DIM_FF = 256           # lane-dense (multiple of 128)
DROPOUT_P = 0.1        # nn.Dropout is identity at inference -> not applied

ROW_TILE = 256         # rows per grid step once rows grow beyond one tile


# ------------------------------- kernel -------------------------------------
def feedforward_kernel(x_ref, w1_ref, b1_ref, w2_ref, b2_ref, out_ref,
                       *, mxu_dtype):
    """x_ref/out_ref: (rows_tile, D); w1:(D,F) b1:(1,F) w2:(F,D) b2:(1,D).

    Matmul operands are optionally cast to bf16 (MXU-native on v6e/v7x) while
    accumulation, bias-add and ReLU stay in float32.
    """
    x = x_ref[...]
    w1 = w1_ref[...]
    w2 = w2_ref[...]
    if mxu_dtype is not None:
        x = x.astype(mxu_dtype)
        w1 = w1.astype(mxu_dtype)
        w2 = w2.astype(mxu_dtype)

    # fc1 + ReLU  (dropout is identity at inference)
    h = jnp.dot(x, w1, preferred_element_type=jnp.float32) + b1_ref[...]
    h = jnp.maximum(h, 0.0)                                    # (rows, DIM_FF)
    if mxu_dtype is not None:
        h = h.astype(mxu_dtype)

    # fc2  (dropout is identity at inference)
    y = jnp.dot(h, w2, preferred_element_type=jnp.float32) + b2_ref[...]
    out_ref[...] = y.astype(out_ref.dtype)                     # (rows, D)


# ------------------------------- wrapper -------------------------------------
def feedforward_forward(x, params, *, use_bf16_matmul=True, row_tile=ROW_TILE):
    """x: (B, T, D_MODEL) float32 -> (B, T, D_MODEL) float32."""
    Bx, Tx, Dx = x.shape
    rows = Bx * Tx
    x2d = x.reshape(rows, Dx)                 # flatten (B, T) -> rows (free)

    w1, b1, w2, b2 = params['w1'], params['b1'], params['w2'], params['b2']
    dim_ff = w1.shape[1]

    kernel = functools.partial(
        feedforward_kernel,
        mxu_dtype=jnp.bfloat16 if use_bf16_matmul else None)
    out_shape = jax.ShapeDtypeStruct((rows, Dx), x.dtype)

    if rows > row_tile and rows % row_tile == 0:
        # Row grid: weights/biases map to block (0, 0) every step so they stay
        # VMEM-resident; "parallel" lets v7x's two TensorCores split the rows.
        y2d = pl.pallas_call(
            kernel,
            out_shape=out_shape,
            grid=(rows // row_tile,),
            in_specs=[
                pl.BlockSpec((row_tile, Dx), lambda i: (i, 0)),
                pl.BlockSpec((Dx, dim_ff), lambda i: (0, 0)),
                pl.BlockSpec((1, dim_ff), lambda i: (0, 0)),
                pl.BlockSpec((dim_ff, Dx), lambda i: (0, 0)),
                pl.BlockSpec((1, Dx), lambda i: (0, 0)),
            ],
            out_specs=pl.BlockSpec((row_tile, Dx), lambda i: (i, 0)),
            compiler_params=pltpu.CompilerParams(
                dimension_semantics=("parallel",)),
        )(x2d, w1, b1, w2, b2)
    else:
        # Whole problem is a few hundred KiB: single invocation, whole arrays
        # in VMEM, no grid / tiling / pipelining.
        vmem = pl.BlockSpec(memory_space=pltpu.MemorySpace.VMEM)
        y2d = pl.pallas_call(
            kernel,
            out_shape=out_shape,
            in_specs=[vmem] * 5,
            out_specs=vmem,
        )(x2d, w1, b1, w2, b2)

    return y2d.reshape(Bx, Tx, Dx)


# --------------------------- parameter init ----------------------------------
def _linear(key, fan_in, fan_out):
    # PyTorch nn.Linear default init: uniform(-1/sqrt(fan_in), +1/sqrt(fan_in)),
    # weight stored pre-transposed as (fan_in, fan_out), bias as (1, fan_out).
    k1, k2 = jax.random.split(key)
    bound = 1.0 / math.sqrt(fan_in)
    w = jax.random.uniform(k1, (fan_in, fan_out), jnp.float32, -bound, bound)
    b = jax.random.uniform(k2, (1, fan_out), jnp.float32, -bound, bound)
    return w, b


def make_params(key, d_model, dim_ff):
    k1, k2 = jax.random.split(key)
    w1, b1 = _linear(k1, d_model, dim_ff)
    w2, b2 = _linear(k2, dim_ff, d_model)
    return dict(w1=w1, b1=b1, w2=w2, b2=b2)


# ------------------------- pure-JAX reference --------------------------------
def reference_forward(x, p):
    hp = jax.lax.Precision.HIGHEST
    h = jnp.maximum(jnp.einsum('btd,df->btf', x, p['w1'], precision=hp) + p['b1'], 0.0)
    return jnp.einsum('btf,fd->btd', h, p['w2'], precision=hp) + p['b2']


# --------------------------------- main ---------------------------------------
if __name__ == "__main__":
    key = jax.random.PRNGKey(0)
    kx, kp = jax.random.split(key)
    params = make_params(kp, D_MODEL, DIM_FF)

    # --- small shape: single-call, no-grid path -------------------------------
    x = jax.random.normal(kx, (B, T, D_MODEL), jnp.float32)
    ref = reference_forward(x, params)

    # f32 MXU operands: tight check against the f32 reference.
    out_f32 = jax.block_until_ready(
        feedforward_forward(x, params, use_bf16_matmul=False))
    assert out_f32.shape == (B, T, D_MODEL)
    assert jnp.allclose(out_f32, ref, atol=1e-4, rtol=1e-4), "f32 path mismatch"

    # bf16 MXU operands (f32 accumulation): looser tolerance vs f32 reference.
    out_bf16 = jax.block_until_ready(feedforward_forward(x, params))
    assert jnp.allclose(out_bf16, ref, atol=5e-2, rtol=5e-2), "bf16 path mismatch"

    # --- larger row count: exercises the row-grid / resident-weight path ------
    x_big = jax.random.normal(jax.random.PRNGKey(1), (2, 256, D_MODEL), jnp.float32)
    ref_big = reference_forward(x_big, params)

    out_big_f32 = jax.block_until_ready(
        feedforward_forward(x_big, params, use_bf16_matmul=False))
    assert jnp.allclose(out_big_f32, ref_big, atol=1e-4, rtol=1e-4), \
        "grid f32 path mismatch"

    out_big_bf16 = jax.block_until_ready(feedforward_forward(x_big, params))
    assert jnp.allclose(out_big_bf16, ref_big, atol=5e-2, rtol=5e-2), \
        "grid bf16 path mismatch"

    print("KERNEL_OK")
</pallas_src>

<mosaic_0001>
module attributes {stable_mosaic.version = 11 : i64} {
  func.func @feedforward_kernel(%arg0: memref<128x128xf32, #tpu.memory_space<vmem>>, %arg1: memref<128x256xf32, #tpu.memory_space<vmem>>, %arg2: memref<1x256xf32, #tpu.memory_space<vmem>>, %arg3: memref<256x128xf32, #tpu.memory_space<vmem>>, %arg4: memref<1x128xf32, #tpu.memory_space<vmem>>, %arg5: memref<128x128xf32, #tpu.memory_space<vmem>>) attributes {dimension_semantics = [], scalar_prefetch = 0 : i64, scratch_operands = 0 : i64, tpu.core_type = #tpu.core_type<tc>} {
    %c0 = arith.constant 0 : index
    %c0_0 = arith.constant 0 : index
    %0 = vector.load %arg0[%c0, %c0_0] : memref<128x128xf32, #tpu.memory_space<vmem>>, vector<128x128xf32>
    %c0_1 = arith.constant 0 : index
    %c0_2 = arith.constant 0 : index
    %1 = vector.load %arg1[%c0_1, %c0_2] : memref<128x256xf32, #tpu.memory_space<vmem>>, vector<128x256xf32>
    %c0_3 = arith.constant 0 : index
    %c0_4 = arith.constant 0 : index
    %2 = vector.load %arg3[%c0_3, %c0_4] : memref<256x128xf32, #tpu.memory_space<vmem>>, vector<256x128xf32>
    %cst = arith.constant dense<0.000000e+00> : vector<128x256xf32>
    %3 = tpu.matmul %0, %1, %cst {dimension_numbers = #tpu.dot_dimension_numbers<[1], [0], [0], [1], [0, 0, 1, 1], [], []>} : vector<128x128xf32>, vector<128x256xf32>, vector<128x256xf32> -> vector<128x256xf32>
    %c0_5 = arith.constant 0 : index
    %c0_6 = arith.constant 0 : index
    %4 = vector.load %arg2[%c0_5, %c0_6] : memref<1x256xf32, #tpu.memory_space<vmem>>, vector<1x256xf32>
    %5 = vector.broadcast %4 : vector<1x256xf32> to vector<128x256xf32>
    %6 = arith.addf %3, %5 : vector<128x256xf32>
    %cst_7 = arith.constant 0.000000e+00 : f32
    %7 = vector.broadcast %cst_7 : f32 to vector<128x256xf32>
    %8 = arith.maximumf %6, %7 : vector<128x256xf32>
    %cst_8 = arith.constant dense<0.000000e+00> : vector<128x128xf32>
    %9 = tpu.matmul %8, %2, %cst_8 {dimension_numbers = #tpu.dot_dimension_numbers<[1], [0], [0], [1], [0, 0, 1, 1], [], []>} : vector<128x256xf32>, vector<256x128xf32>, vector<128x128xf32> -> vector<128x128xf32>
    %c0_9 = arith.constant 0 : index
    %c0_10 = arith.constant 0 : index
    %10 = vector.load %arg4[%c0_9, %c0_10] : memref<1x128xf32, #tpu.memory_space<vmem>>, vector<1x128xf32>
    %11 = vector.broadcast %10 : vector<1x128xf32> to vector<128x128xf32>
    %12 = arith.addf %9, %11 : vector<128x128xf32>
    %c0_11 = arith.constant 0 : index
    %c0_12 = arith.constant 0 : index
    %13 = vector.load %arg5[%c0_11, %c0_12] : memref<128x128xf32, #tpu.memory_space<vmem>>, vector<128x128xf32>
    tpu.vector_store %arg5[%c0_11, %c0_12], %12 {strides = array<i32>} : memref<128x128xf32, #tpu.memory_space<vmem>>, vector<128x128xf32>,
    return
  }
}

</mosaic_0001>

<llo_original>
// kernel: tpu_custom_call.1
$region0: #{tpu_custom_call.1}
  #allocation0 [shape = 'u32[]', space=smem, size = 0x4, offset = 0x4, fixed_abs, tag = 'smem constant byte address 0x4 - core index']
  #allocation1 [shape = 'u32[72,128]{1,0:T(1,128)}', space=vmem, size = 0x9000, scoped, tag = 'internal scratch']
  %s0 = inlined_call_operand.hbm [shape: f32[128,128], index: 0, kind: input, shape index: {}]
  %s1 = inlined_call_operand.hbm [shape: f32[128,256], index: 1, kind: input, shape index: {}]
  %s2 = inlined_call_operand.hbm [shape: f32[1,256], index: 2, kind: input, shape index: {}]
  %s3 = inlined_call_operand.hbm [shape: f32[256,128], index: 3, kind: input, shape index: {}]
  %s4 = inlined_call_operand.vmem [shape: f32[1,128], index: 4, kind: input, shape index: {}]
  %s5 = inlined_call_operand.hbm [shape: f32[128,128], index: 5, kind: output, shape index: {}]
  %s6 = sld [smem:[#allocation0]]
  $region46: #{tpu_custom_call.1} parent=0
    _
  %s8 = ssub.s32 1, %s6
  %s9 = scalar_select 0, %s8, %s6
  $region1: #{tpu_custom_call.1} parent=0
    #allocation2 [shape = 'u8[65536]{0}', space=vmem, size = 0x10000, scoped, tag = 'input window, operand 0, single buffered']
    #allocation3 [shape = 's32[1]{0}', space=sflag, size = 0x4, scoped, tag = 'scoped memory for tpu_custom_call.1']
    #allocation4 [shape = 's32[1]{0}', space=sflag, size = 0x4, scoped, tag = 'scoped memory for tpu_custom_call.1']
    #allocation5 [shape = 'u8[131072]{0}', space=vmem, size = 0x20000, scoped, tag = 'input window, operand 1, single buffered']
    #allocation6 [shape = 's32[1]{0}', space=sflag, size = 0x4, scoped, tag = 'scoped memory for tpu_custom_call.1']
    #allocation7 [shape = 'u8[1024]{0}', space=vmem, size = 0x400, scoped, tag = 'input window, operand 2, single buffered']
    #allocation8 [shape = 'u8[131072]{0}', space=vmem, size = 0x20000, scoped, tag = 'input window, operand 3, single buffered']
    #allocation9 [shape = 's32[1]{0}', space=sflag, size = 0x4, scoped, tag = 'scoped memory for tpu_custom_call.1']
    #allocation10 [shape = 'u8[65536]{0}', space=vmem, size = 0x10000, scoped, tag = 'output window, operand 0, single buffered']
    %10 = vsyncpa [#allocation3], 0
    %11 = vsyncpa [#allocation6], 0
    %12 = vsyncpa [#allocation9], 0
    %13 = vsyncpa [#allocation4], 0
    // Predicated region
    $region2: #{tpu_custom_call.1} parent=1 // pred_check
      _
    $region3: #{tpu_custom_call.1} parent=1 // pred_check_branch
      %15 = sbr.rel (0) target = $region5
    $region4: #{tpu_custom_call.1} parent=1 // pred_region
      %17 = vsyncadd [#allocation3], 0
      %s18 = sshll.u32 %s0, 4
      %s19 = int_to_ptr.hbm [resolvable:$true] %s18
      %s20 = sshll.u32 [#allocation2], 4
      %s21 = int_to_ptr.vmem [resolvable:$true] %s20
      %26 = dma.hbm_to_vmem [thread:$0]  %s19, 2048, %s21, [#allocation3], 128, 128, 8
    $region5: #{tpu_custom_call.1} parent=1 // pred_fallthru
      _
    // Predicated region
    $region6: #{tpu_custom_call.1} parent=1 // pred_check
      _
    $region7: #{tpu_custom_call.1} parent=1 // pred_check_branch
      %28 = sbr.rel (0) target = $region9
    $region8: #{tpu_custom_call.1} parent=1 // pred_region
      %30 = vsyncadd [#allocation6], 0
      %s31 = sshll.u32 %s1, 4
      %s32 = int_to_ptr.hbm [resolvable:$true] %s31
      %s33 = sshll.u32 [#allocation5], 4
      %s34 = int_to_ptr.vmem [resolvable:$true] %s33
      %39 = dma.hbm_to_vmem [thread:$0]  %s32, 4096, %s34, [#allocation6], 256, 256, 16
    $region9: #{tpu_custom_call.1} parent=1 // pred_fallthru
      _
    // Predicated region
    $region10: #{tpu_custom_call.1} parent=1 // pred_check
      _
    $region11: #{tpu_custom_call.1} parent=1 // pred_check_branch
      %41 = sbr.rel (0) target = $region13
    $region12: #{tpu_custom_call.1} parent=1 // pred_region
      %43 = vsyncadd [#allocation6], 0
      %s45 = sshll.u32 %s2, 4
      %s46 = int_to_ptr.hbm [resolvable:$true] %s45
      %s47 = sshll.u32 [#allocation7], 4
      %s48 = int_to_ptr.vmem [resolvable:$true] %s47
      %50 = dma.hbm_to_vmem [thread:$0]  %s46, 32, %s48, [#allocation6]
    $region13: #{tpu_custom_call.1} parent=1 // pred_fallthru
      _
    // Predicated region
    $region14: #{tpu_custom_call.1} parent=1 // pred_check
      _
    $region15: #{tpu_custom_call.1} parent=1 // pred_check_branch
      %52 = sbr.rel (0) target = $region17
    $region16: #{tpu_custom_call.1} parent=1 // pred_region
      %54 = vsyncadd [#allocation9], 0
      %s55 = sshll.u32 %s3, 4
      %s56 = int_to_ptr.hbm [resolvable:$true] %s55
      %s57 = sshll.u32 [#allocation8], 4
      %s58 = int_to_ptr.vmem [resolvable:$true] %s57
      %63 = dma.hbm_to_vmem [thread:$0]  %s56, 4096, %s58, [#allocation9], 128, 128, 8
    $region17: #{tpu_custom_call.1} parent=1 // pred_fallthru
      _
    // Predicated region
    $region18: #{tpu_custom_call.1} parent=1 // pred_check
      _
    $region19: #{tpu_custom_call.1} parent=1 // pred_check_branch
      %65 = sbr.rel (0) target = $region21
    $region20: #{tpu_custom_call.1} parent=1 // pred_region
      _
    $region21: #{tpu_custom_call.1} parent=1 // pred_fallthru
      _
    // Predicated region
    $region22: #{tpu_custom_call.1} parent=1 // pred_check
      _
    $region23: #{tpu_custom_call.1} parent=1 // pred_check_branch
      %67 = sbr.rel (0) target = $region25
    $region24: #{tpu_custom_call.1} parent=1 // pred_region
      %69 = dma.done [#allocation3], 2048
    $region25: #{tpu_custom_call.1} parent=1 // pred_fallthru
      _
    // Predicated region
    $region26: #{tpu_custom_call.1} parent=1 // pred_check
      _
    $region27: #{tpu_custom_call.1} parent=1 // pred_check_branch
      %71 = sbr.rel (0) target = $region29
    $region28: #{tpu_custom_call.1} parent=1 // pred_region
      %73 = dma.done [#allocation6], 4096
    $region29: #{tpu_custom_call.1} parent=1 // pred_fallthru
      _
    // Predicated region
    $region30: #{tpu_custom_call.1} parent=1 // pred_check
      _
    $region31: #{tpu_custom_call.1} parent=1 // pred_check_branch
      %75 = sbr.rel (0) target = $region33
    $region32: #{tpu_custom_call.1} parent=1 // pred_region
      %77 = dma.done [#allocation6], 32
    $region33: #{tpu_custom_call.1} parent=1 // pred_fallthru
      _
    // Predicated region
    $region34: #{tpu_custom_call.1} parent=1 // pred_check
      _
    $region35: #{tpu_custom_call.1} parent=1 // pred_check_branch
      %79 = sbr.rel (0) target = $region37
    $region36: #{tpu_custom_call.1} parent=1 // pred_region
      %81 = dma.done [#allocation9], 4096
    $region37: #{tpu_custom_call.1} parent=1 // pred_fallthru
      _
    %v82 = vld [vmem:[#allocation2] sm:$0xff]
    %v83 = vld [vmem:[#allocation2 + $0x8] sm:$0xff]
    %v84 = vld [vmem:[#allocation2 + $0x10] sm:$0xff]
    %v85 = vld [vmem:[#allocation2 + $0x18] sm:$0xff]
    %v86 = vld [vmem:[#allocation2 + $0x20] sm:$0xff]
    %v87 = vld [vmem:[#allocation2 + $0x28] sm:$0xff]
    %v88 = vld [vmem:[#allocation2 + $0x30] sm:$0xff]
    %v89 = vld [vmem:[#allocation2 + $0x38] sm:$0xff]
    %v90 = vld [vmem:[#allocation2 + $0x40] sm:$0xff]
    %v91 = vld [vmem:[#allocation2 + $0x48] sm:$0xff]
    %v92 = vld [vmem:[#allocation2 + $0x50] sm:$0xff]
    %v93 = vld [vmem:[#allocation2 + $0x58] sm:$0xff]
    %v94 = vld [vmem:[#allocation2 + $0x60] sm:$0xff]
    %v95 = vld [vmem:[#allocation2 + $0x68] sm:$0xff]
    %v96 = vld [vmem:[#allocation2 + $0x70] sm:$0xff]
    %v97 = vld [vmem:[#allocation2 + $0x78] sm:$0xff]
    %v98 = vld [vmem:[#allocation5] sm:$0xff]
    %v99 = vld [vmem:[#allocation5 + $0x8] sm:$0xff]
    %v100 = vld [vmem:[#allocation5 + $0x10] sm:$0xff]
    %v101 = vld [vmem:[#allocation5 + $0x18] sm:$0xff]
    %v102 = vld [vmem:[#allocation5 + $0x20] sm:$0xff]
    %v103 = vld [vmem:[#allocation5 + $0x28] sm:$0xff]
    %v104 = vld [vmem:[#allocation5 + $0x30] sm:$0xff]
    %v105 = vld [vmem:[#allocation5 + $0x38] sm:$0xff]
    %v106 = vld [vmem:[#allocation5 + $0x40] sm:$0xff]
    %v107 = vld [vmem:[#allocation5 + $0x48] sm:$0xff]
    %v108 = vld [vmem:[#allocation5 + $0x50] sm:$0xff]
    %v109 = vld [vmem:[#allocation5 + $0x58] sm:$0xff]
    %v110 = vld [vmem:[#allocation5 + $0x60] sm:$0xff]
    %v111 = vld [vmem:[#allocation5 + $0x68] sm:$0xff]
    %v112 = vld [vmem:[#allocation5 + $0x70] sm:$0xff]
    %v113 = vld [vmem:[#allocation5 + $0x78] sm:$0xff]
    %v114 = vld [vmem:[#allocation5 + $0x80] sm:$0xff]
    %v115 = vld [vmem:[#allocation5 + $0x88] sm:$0xff]
    %v116 = vld [vmem:[#allocation5 + $0x90] sm:$0xff]
    %v117 = vld [vmem:[#allocation5 + $0x98] sm:$0xff]
    %v118 = vld [vmem:[#allocation5 + $0xa0] sm:$0xff]
    %v119 = vld [vmem:[#allocation5 + $0xa8] sm:$0xff]
    %v120 = vld [vmem:[#allocation5 + $0xb0] sm:$0xff]
    %v121 = vld [vmem:[#allocation5 + $0xb8] sm:$0xff]
    %v122 = vld [vmem:[#allocation5 + $0xc0] sm:$0xff]
    %v123 = vld [vmem:[#allocation5 + $0xc8] sm:$0xff]
    %v124 = vld [vmem:[#allocation5 + $0xd0] sm:$0xff]
    %v125 = vld [vmem:[#allocation5 + $0xd8] sm:$0xff]
    %v126 = vld [vmem:[#allocation5 + $0xe0] sm:$0xff]
    %v127 = vld [vmem:[#allocation5 + $0xe8] sm:$0xff]
    %v128 = vld [vmem:[#allocation5 + $0xf0] sm:$0xff]
    %v129 = vld [vmem:[#allocation5 + $0xf8] sm:$0xff]
    %v130 = vld [vmem:[#allocation8] sm:$0xff]
    %v131 = vld [vmem:[#allocation8 + $0x8] sm:$0xff]
    %v132 = vld [vmem:[#allocation8 + $0x10] sm:$0xff]
    %v133 = vld [vmem:[#allocation8 + $0x18] sm:$0xff]
    %v134 = vld [vmem:[#allocation8 + $0x20] sm:$0xff]
    %v135 = vld [vmem:[#allocation8 + $0x28] sm:$0xff]
    %v136 = vld [vmem:[#allocation8 + $0x30] sm:$0xff]
    %v137 = vld [vmem:[#allocation8 + $0x38] sm:$0xff]
    %v138 = vld [vmem:[#allocation8 + $0x40] sm:$0xff]
    %v139 = vld [vmem:[#allocation8 + $0x48] sm:$0xff]
    %v140 = vld [vmem:[#allocation8 + $0x50] sm:$0xff]
    %v141 = vld [vmem:[#allocation8 + $0x58] sm:$0xff]
    %v142 = vld [vmem:[#allocation8 + $0x60] sm:$0xff]
    %v143 = vld [vmem:[#allocation8 + $0x68] sm:$0xff]
    %v144 = vld [vmem:[#allocation8 + $0x70] sm:$0xff]
    %v145 = vld [vmem:[#allocation8 + $0x78] sm:$0xff]
    %v146 = vld [vmem:[#allocation8 + $0x80] sm:$0xff]
    %v147 = vld [vmem:[#allocation8 + $0x88] sm:$0xff]
    %v148 = vld [vmem:[#allocation8 + $0x90] sm:$0xff]
    %v149 = vld [vmem:[#allocation8 + $0x98] sm:$0xff]
    %v150 = vld [vmem:[#allocation8 + $0xa0] sm:$0xff]
    %v151 = vld [vmem:[#allocation8 + $0xa8] sm:$0xff]
    %v152 = vld [vmem:[#allocation8 + $0xb0] sm:$0xff]
    %v153 = vld [vmem:[#allocation8 + $0xb8] sm:$0xff]
    %v154 = vld [vmem:[#allocation8 + $0xc0] sm:$0xff]
    %v155 = vld [vmem:[#allocation8 + $0xc8] sm:$0xff]
    %v156 = vld [vmem:[#allocation8 + $0xd0] sm:$0xff]
    %v157 = vld [vmem:[#allocation8 + $0xd8] sm:$0xff]
    %v158 = vld [vmem:[#allocation8 + $0xe0] sm:$0xff]
    %v159 = vld [vmem:[#allocation8 + $0xe8] sm:$0xff]
    %v160 = vld [vmem:[#allocation8 + $0xf0] sm:$0xff]
    %v161 = vld [vmem:[#allocation8 + $0xf8] sm:$0xff]
    %v162 = vld [vmem:[#allocation7] sm:$0x3]
    %v164 = vperm.slane %v162, 0
    %v165 = vperm.slane %v162, 1
    %168 = vmatpush.msra.mxu0 %v128
    %169 = vmatpush.msra.mxu0 %v126
    %170 = vmatpush.msra.mxu0 %v124
    %171 = vmatpush.msra.mxu0 %v122
    %172 = vmatpush.msra.mxu0 %v120
    %173 = vmatpush.msra.mxu0 %v118
    %174 = vmatpush.msra.mxu0 %v116
    %175 = vmatpush.msra.mxu0 %v114
    %176 = vmatpush.msra.mxu0 %v112
    %177 = vmatpush.msra.mxu0 %v110
    %178 = vmatpush.msra.mxu0 %v108
    %179 = vmatpush.msra.mxu0 %v106
    %180 = vmatpush.msra.mxu0 %v104
    %181 = vmatpush.msra.mxu0 %v102
    %182 = vmatpush.msra.mxu0 %v100
    %183 = vmatpush.msra.mxu0 %v98
    %184 = vmatmul.f32.gmra.mxu0 %v82
    %v185 = vpop.f32.mrf.mxu0
    %v186 = vadd.f32 %v164, %v185
    %187 = vmatmul.f32.gmra.mxu0 %v83
    %v188 = vpop.f32.mrf.mxu0
    %v189 = vadd.f32 %v164, %v188
    %190 = vmatmul.f32.gmra.mxu0 %v84
    %v191 = vpop.f32.mrf.mxu0
    %v192 = vadd.f32 %v164, %v191
    %193 = vmatmul.f32.gmra.mxu0 %v85
    %v194 = vpop.f32.mrf.mxu0
    %v195 = vadd.f32 %v164, %v194
    %196 = vmatmul.f32.gmra.mxu0 %v86
    %v197 = vpop.f32.mrf.mxu0
    %v198 = vadd.f32 %v164, %v197
    %199 = vmatmul.f32.gmra.mxu0 %v87
    %v200 = vpop.f32.mrf.mxu0
    %v201 = vadd.f32 %v164, %v200
    %202 = vmatmul.f32.gmra.mxu0 %v88
    %v203 = vpop.f32.mrf.mxu0
    %v204 = vadd.f32 %v164, %v203
    %205 = vmatmul.f32.gmra.mxu0 %v89
    %v206 = vpop.f32.mrf.mxu0
    %v207 = vadd.f32 %v164, %v206
    %208 = vmatmul.f32.gmra.mxu0 %v90
    %v209 = vpop.f32.mrf.mxu0
    %v210 = vadd.f32 %v164, %v209
    %211 = vmatmul.f32.gmra.mxu0 %v91
    %v212 = vpop.f32.mrf.mxu0
    %v213 = vadd.f32 %v164, %v212
    %214 = vmatmul.f32.gmra.mxu0 %v92
    %v215 = vpop.f32.mrf.mxu0
    %v216 = vadd.f32 %v164, %v215
    %217 = vmatmul.f32.gmra.mxu0 %v93
    %v218 = vpop.f32.mrf.mxu0
    %v219 = vadd.f32 %v164, %v218
    %220 = vmatmul.f32.gmra.mxu0 %v94
    %v221 = vpop.f32.mrf.mxu0
    %v222 = vadd.f32 %v164, %v221
    %223 = vmatmul.f32.gmra.mxu0 %v95
    %v224 = vpop.f32.mrf.mxu0
    %v225 = vadd.f32 %v164, %v224
    %226 = vmatmul.f32.gmra.mxu0 %v96
    %v227 = vpop.f32.mrf.mxu0
    %v228 = vadd.f32 %v164, %v227
    %229 = vmatmul.f32.gmra.mxu0 %v97
    %v230 = vpop.f32.mrf.mxu0
    %v231 = vadd.f32 %v164, %v230
    %232 = vdwg.mxu0
    %233 = vmatpush.msra.mxu0 %v129
    %234 = vmatpush.msra.mxu0 %v127
    %235 = vmatpush.msra.mxu0 %v125
    %236 = vmatpush.msra.mxu0 %v123
    %237 = vmatpush.msra.mxu0 %v121
    %238 = vmatpush.msra.mxu0 %v119
    %239 = vmatpush.msra.mxu0 %v117
    %240 = vmatpush.msra.mxu0 %v115
    %241 = vmatpush.msra.mxu0 %v113
    %242 = vmatpush.msra.mxu0 %v111
    %243 = vmatpush.msra.mxu0 %v109
    %244 = vmatpush.msra.mxu0 %v107
    %245 = vmatpush.msra.mxu0 %v105
    %246 = vmatpush.msra.mxu0 %v103
    %247 = vmatpush.msra.mxu0 %v101
    %248 = vmatpush.msra.mxu0 %v99
    %249 = vmatmul.f32.gmra.mxu0 %v82
    %v250 = vpop.f32.mrf.mxu0
    %v251 = vadd.f32 %v165, %v250
    %252 = vmatmul.f32.gmra.mxu0 %v83
    %v253 = vpop.f32.mrf.mxu0
    %v254 = vadd.f32 %v165, %v253
    %255 = vmatmul.f32.gmra.mxu0 %v84
    %v256 = vpop.f32.mrf.mxu0
    %v257 = vadd.f32 %v165, %v256
    %258 = vmatmul.f32.gmra.mxu0 %v85
    %v259 = vpop.f32.mrf.mxu0
    %v260 = vadd.f32 %v165, %v259
    %261 = vmatmul.f32.gmra.mxu0 %v86
    %v262 = vpop.f32.mrf.mxu0
    %v263 = vadd.f32 %v165, %v262
    %264 = vmatmul.f32.gmra.mxu0 %v87
    %v265 = vpop.f32.mrf.mxu0
    %v266 = vadd.f32 %v165, %v265
    %267 = vmatmul.f32.gmra.mxu0 %v88
    %v268 = vpop.f32.mrf.mxu0
    %v269 = vadd.f32 %v165, %v268
    %270 = vmatmul.f32.gmra.mxu0 %v89
    %v271 = vpop.f32.mrf.mxu0
    %v272 = vadd.f32 %v165, %v271
    %273 = vmatmul.f32.gmra.mxu0 %v90
    %v274 = vpop.f32.mrf.mxu0
    %v275 = vadd.f32 %v165, %v274
    %276 = vmatmul.f32.gmra.mxu0 %v91
    %v277 = vpop.f32.mrf.mxu0
    %v278 = vadd.f32 %v165, %v277
    %279 = vmatmul.f32.gmra.mxu0 %v92
    %v280 = vpop.f32.mrf.mxu0
    %v281 = vadd.f32 %v165, %v280
    %282 = vmatmul.f32.gmra.mxu0 %v93
    %v283 = vpop.f32.mrf.mxu0
    %v284 = vadd.f32 %v165, %v283
    %285 = vmatmul.f32.gmra.mxu0 %v94
    %v286 = vpop.f32.mrf.mxu0
    %v287 = vadd.f32 %v165, %v286
    %288 = vmatmul.f32.gmra.mxu0 %v95
    %v289 = vpop.f32.mrf.mxu0
    %v290 = vadd.f32 %v165, %v289
    %291 = vmatmul.f32.gmra.mxu0 %v96
    %v292 = vpop.f32.mrf.mxu0
    %v293 = vadd.f32 %v165, %v292
    %294 = vmatmul.f32.gmra.mxu0 %v97
    %v295 = vpop.f32.mrf.mxu0
    %v296 = vadd.f32 %v165, %v295
    %297 = vdwg.mxu0
    %v298 = vmax.f32 %v186, 0.0
    %v299 = vmax.f32 %v251, 0.0
    %v300 = vmax.f32 %v189, 0.0
    %v301 = vmax.f32 %v254, 0.0
    %v302 = vmax.f32 %v192, 0.0
    %v303 = vmax.f32 %v257, 0.0
    %v304 = vmax.f32 %v195, 0.0
    %v305 = vmax.f32 %v260, 0.0
    %v306 = vmax.f32 %v198, 0.0
    %v307 = vmax.f32 %v263, 0.0
    %v308 = vmax.f32 %v201, 0.0
    %v309 = vmax.f32 %v266, 0.0
    %v310 = vmax.f32 %v204, 0.0
    %v311 = vmax.f32 %v269, 0.0
    %v312 = vmax.f32 %v207, 0.0
    %v313 = vmax.f32 %v272, 0.0
    %v314 = vmax.f32 %v210, 0.0
    %v315 = vmax.f32 %v275, 0.0
    %v316 = vmax.f32 %v213, 0.0
    %v317 = vmax.f32 %v278, 0.0
    %v318 = vmax.f32 %v216, 0.0
    %v319 = vmax.f32 %v281, 0.0
    %v320 = vmax.f32 %v219, 0.0
    %v321 = vmax.f32 %v284, 0.0
    %v322 = vmax.f32 %v222, 0.0
    %v323 = vmax.f32 %v287, 0.0
    %v324 = vmax.f32 %v225, 0.0
    %v325 = vmax.f32 %v290, 0.0
    %v326 = vmax.f32 %v228, 0.0
    %v327 = vmax.f32 %v293, 0.0
    %v328 = vmax.f32 %v231, 0.0
    %v329 = vmax.f32 %v296, 0.0
    %v330 = vld [vmem:[%s4] sm:$0x1]
    %v332 = vperm.slane %v330, 0
    %334 = vmatpush.msra.mxu0 %v145
    %335 = vmatpush.msra.mxu0 %v144
    %336 = vmatpush.msra.mxu0 %v143
    %337 = vmatpush.msra.mxu0 %v142
    %338 = vmatpush.msra.mxu0 %v141
    %339 = vmatpush.msra.mxu0 %v140
    %340 = vmatpush.msra.mxu0 %v139
    %341 = vmatpush.msra.mxu0 %v138
    %342 = vmatpush.msra.mxu0 %v137
    %343 = vmatpush.msra.mxu0 %v136
    %344 = vmatpush.msra.mxu0 %v135
    %345 = vmatpush.msra.mxu0 %v134
    %346 = vmatpush.msra.mxu0 %v133
    %347 = vmatpush.msra.mxu0 %v132
    %348 = vmatpush.msra.mxu0 %v131
    %349 = vmatpush.msra.mxu0 %v130
    %350 = vmatmul.f32.gmra.mxu0 %v298
    %v351 = vpop.f32.mrf.mxu0
    %v352 = vadd.f32 %v332, %v351
    %353 = vmatmul.f32.gmra.mxu0 %v300
    %v354 = vpop.f32.mrf.mxu0
    %v355 = vadd.f32 %v332, %v354
    %356 = vmatmul.f32.gmra.mxu0 %v302
    %v357 = vpop.f32.mrf.mxu0
    %v358 = vadd.f32 %v332, %v357
    %359 = vmatmul.f32.gmra.mxu0 %v304
    %v360 = vpop.f32.mrf.mxu0
    %v361 = vadd.f32 %v332, %v360
    %362 = vmatmul.f32.gmra.mxu0 %v306
    %v363 = vpop.f32.mrf.mxu0
    %v364 = vadd.f32 %v332, %v363
    %365 = vmatmul.f32.gmra.mxu0 %v308
    %v366 = vpop.f32.mrf.mxu0
    %v367 = vadd.f32 %v332, %v366
    %368 = vmatmul.f32.gmra.mxu0 %v310
    %v369 = vpop.f32.mrf.mxu0
    %v370 = vadd.f32 %v332, %v369
    %371 = vmatmul.f32.gmra.mxu0 %v312
    %v372 = vpop.f32.mrf.mxu0
    %v373 = vadd.f32 %v332, %v372
    %374 = vmatmul.f32.gmra.mxu0 %v314
    %v375 = vpop.f32.mrf.mxu0
    %v376 = vadd.f32 %v332, %v375
    %377 = vmatmul.f32.gmra.mxu0 %v316
    %v378 = vpop.f32.mrf.mxu0
    %v379 = vadd.f32 %v332, %v378
    %380 = vmatmul.f32.gmra.mxu0 %v318
    %v381 = vpop.f32.mrf.mxu0
    %v382 = vadd.f32 %v332, %v381
    %383 = vmatmul.f32.gmra.mxu0 %v320
    %v384 = vpop.f32.mrf.mxu0
    %v385 = vadd.f32 %v332, %v384
    %386 = vmatmul.f32.gmra.mxu0 %v322
    %v387 = vpop.f32.mrf.mxu0
    %v388 = vadd.f32 %v332, %v387
    %389 = vmatmul.f32.gmra.mxu0 %v324
    %v390 = vpop.f32.mrf.mxu0
    %v391 = vadd.f32 %v332, %v390
    %392 = vmatmul.f32.gmra.mxu0 %v326
    %v393 = vpop.f32.mrf.mxu0
    %v394 = vadd.f32 %v332, %v393
    %395 = vmatmul.f32.gmra.mxu0 %v328
    %v396 = vpop.f32.mrf.mxu0
    %v397 = vadd.f32 %v332, %v396
    %398 = vdwg.mxu0
    %399 = vmatpush.msra.mxu0 %v161
    %400 = vmatpush.msra.mxu0 %v160
    %401 = vmatpush.msra.mxu0 %v159
    %402 = vmatpush.msra.mxu0 %v158
    %403 = vmatpush.msra.mxu0 %v157
    %404 = vmatpush.msra.mxu0 %v156
    %405 = vmatpush.msra.mxu0 %v155
    %406 = vmatpush.msra.mxu0 %v154
    %407 = vmatpush.msra.mxu0 %v153
    %408 = vmatpush.msra.mxu0 %v152
    %409 = vmatpush.msra.mxu0 %v151
    %410 = vmatpush.msra.mxu0 %v150
    %411 = vmatpush.msra.mxu0 %v149
    %412 = vmatpush.msra.mxu0 %v148
    %413 = vmatpush.msra.mxu0 %v147
    %414 = vmatpush.msra.mxu0 %v146
    %415 = vmatmul.f32.gmra.mxu0 %v299
    %v416 = vpop.f32.mrf.mxu0
    %v417 = vadd.f32 %v352, %v416
    %418 = vmatmul.f32.gmra.mxu0 %v301
    %v419 = vpop.f32.mrf.mxu0
    %v420 = vadd.f32 %v355, %v419
    %421 = vmatmul.f32.gmra.mxu0 %v303
    %v422 = vpop.f32.mrf.mxu0
    %v423 = vadd.f32 %v358, %v422
    %424 = vmatmul.f32.gmra.mxu0 %v305
    %v425 = vpop.f32.mrf.mxu0
    %v426 = vadd.f32 %v361, %v425
    %427 = vmatmul.f32.gmra.mxu0 %v307
    %v428 = vpop.f32.mrf.mxu0
    %v429 = vadd.f32 %v364, %v428
    %430 = vmatmul.f32.gmra.mxu0 %v309
    %v431 = vpop.f32.mrf.mxu0
    %v432 = vadd.f32 %v367, %v431
    %433 = vmatmul.f32.gmra.mxu0 %v311
    %v434 = vpop.f32.mrf.mxu0
    %v435 = vadd.f32 %v370, %v434
    %436 = vmatmul.f32.gmra.mxu0 %v313
    %v437 = vpop.f32.mrf.mxu0
    %v438 = vadd.f32 %v373, %v437
    %439 = vmatmul.f32.gmra.mxu0 %v315
    %v440 = vpop.f32.mrf.mxu0
    %v441 = vadd.f32 %v376, %v440
    %442 = vmatmul.f32.gmra.mxu0 %v317
    %v443 = vpop.f32.mrf.mxu0
    %v444 = vadd.f32 %v379, %v443
    %445 = vmatmul.f32.gmra.mxu0 %v319
    %v446 = vpop.f32.mrf.mxu0
    %v447 = vadd.f32 %v382, %v446
    %448 = vmatmul.f32.gmra.mxu0 %v321
    %v449 = vpop.f32.mrf.mxu0
    %v450 = vadd.f32 %v385, %v449
    %451 = vmatmul.f32.gmra.mxu0 %v323
    %v452 = vpop.f32.mrf.mxu0
    %v453 = vadd.f32 %v388, %v452
    %454 = vmatmul.f32.gmra.mxu0 %v325
    %v455 = vpop.f32.mrf.mxu0
    %v456 = vadd.f32 %v391, %v455
    %457 = vmatmul.f32.gmra.mxu0 %v327
    %v458 = vpop.f32.mrf.mxu0
    %v459 = vadd.f32 %v394, %v458
    %460 = vmatmul.f32.gmra.mxu0 %v329
    %v461 = vpop.f32.mrf.mxu0
    %v462 = vadd.f32 %v397, %v461
    %463 = vdwg.mxu0
    %464 = vst [vmem:[#allocation10] sm:$0xff] %v417
    %465 = vst [vmem:[#allocation10 + $0x8] sm:$0xff] %v420
    %466 = vst [vmem:[#allocation10 + $0x10] sm:$0xff] %v423
    %467 = vst [vmem:[#allocation10 + $0x18] sm:$0xff] %v426
    %468 = vst [vmem:[#allocation10 + $0x20] sm:$0xff] %v429
    %469 = vst [vmem:[#allocation10 + $0x28] sm:$0xff] %v432
    %470 = vst [vmem:[#allocation10 + $0x30] sm:$0xff] %v435
    %471 = vst [vmem:[#allocation10 + $0x38] sm:$0xff] %v438
    %472 = vst [vmem:[#allocation10 + $0x40] sm:$0xff] %v441
    %473 = vst [vmem:[#allocation10 + $0x48] sm:$0xff] %v444
    %474 = vst [vmem:[#allocation10 + $0x50] sm:$0xff] %v447
    %475 = vst [vmem:[#allocation10 + $0x58] sm:$0xff] %v450
    %476 = vst [vmem:[#allocation10 + $0x60] sm:$0xff] %v453
    %477 = vst [vmem:[#allocation10 + $0x68] sm:$0xff] %v456
    %478 = vst [vmem:[#allocation10 + $0x70] sm:$0xff] %v459
    %479 = vst [vmem:[#allocation10 + $0x78] sm:$0xff] %v462
    // Predicated region
    $region38: #{tpu_custom_call.1} parent=1 // pred_check
      _
    $region39: #{tpu_custom_call.1} parent=1 // pred_check_branch
      %481 = sbr.rel (0) target = $region41
    $region40: #{tpu_custom_call.1} parent=1 // pred_region
      %483 = vsyncadd [#allocation4], 0
      %s484 = sshll.u32 [#allocation10], 4
      %s485 = int_to_ptr.vmem [resolvable:$true] %s484
      %s486 = sshll.u32 %s5, 4
      %s487 = int_to_ptr.hbm [resolvable:$true] %s486
      %492 = dma.vmem_to_hbm [thread:$0]  %s485, 2048, %s487, [#allocation4], 128, 128, 8
    $region41: #{tpu_custom_call.1} parent=1 // pred_fallthru
      _
    // Predicated region
    $region42: #{tpu_custom_call.1} parent=1 // pred_check
      _
    $region43: #{tpu_custom_call.1} parent=1 // pred_check_branch
      %494 = sbr.rel (0) target = $region45
    $region44: #{tpu_custom_call.1} parent=1 // pred_region
      %496 = dma.done [#allocation4], 2048
    $region45: #{tpu_custom_call.1} parent=1 // pred_fallthru
      _
    %497 = vsyncpa [#allocation3], 1
    %498 = vsyncpa [#allocation6], 1
    %499 = vsyncpa [#allocation9], 1
    %500 = vsyncpa [#allocation4], 1

</llo_original>
